<compile_context>
chip_gen: v5e
topology: v5e:2x2
jax: 0.10.0
libtpu: 0.0.40
codegen_flags: <defaults>
</compile_context>

<pallas_src>
import numpy as np
import jax
import jax.numpy as jnp
from jax.experimental import pallas as pl
from jax.experimental.pallas import tpu as pltpu

_LANES = 128            # lane width of a vreg
_TILE_ROWS = 2048       # 2048 x 128 x 4B = 1 MiB per block (in+out double-buffered ~4 MiB VMEM)
_MIN_GRID_STEPS = 8     # keep pipeline depth / megacore sharding when input is large enough
_MIN_PALLAS_N = 1 << 20  # below ~1M elements, plain jnp (XLA-fused) beats a pallas_call launch


def _round_up(x, m):
    return ((x + m - 1) // m) * m


def _eta_weights_kernel(params_ref, loss_ref, out_ref):
    # params_ref : SMEM f32[2] = [eta, mask*eta]
    # loss_ref / out_ref : VMEM tiles, shape (tile_rows, 128)
    eta = params_ref[0]
    hi_scale = params_ref[1]            # mask * eta   (hoisted scalar)
    loss = loss_ref[...]
    hi = loss * hi_scale                # branch: loss >  eta
    lo = 1.0 - loss / eta               # branch: loss <= eta   (== -loss/eta + 1)
    out_ref[...] = jnp.where(loss > eta, hi, lo)


def _eta_weights_jnp(loss, eta, mask):
    """Plain-jnp path for small / fusable inputs (no kernel launch)."""
    hi = loss * (mask * eta)
    lo = -loss / eta + 1.0
    return jnp.where(loss > eta, hi, lo)


def eta_weights_forward(loss, eta, mask, *, force_pallas=False):
    """Pallas equivalent of EtaWeights.forward(loss) for a 1-D loss vector."""
    loss = jnp.asarray(loss, jnp.float32)
    n = loss.shape[0]
    eta = jnp.asarray(eta, jnp.float32).reshape(())
    mask = jnp.asarray(mask, jnp.float32).reshape(())

    if n < _MIN_PALLAS_N and not force_pallas:
        return _eta_weights_jnp(loss, eta, mask)

    # ---- lane-dense [rows, 128] layout ----
    rows = -(-n // _LANES)

    # n % 128 == 0  ->  reshape is a free bitcast, no pad / no slice (zero extra HBM passes).
    # ragged n      ->  pad only to the 128-lane boundary (<= 127 elements), slice at the end.
    padded = (n % _LANES) != 0
    if padded:
        loss2d = jnp.pad(loss, (0, rows * _LANES - n)).reshape(rows, _LANES)
    else:
        loss2d = loss.reshape(rows, _LANES)

    # Tile size: multiple of 8 sublanes, <= 1 MiB, and small enough that the grid keeps
    # >= _MIN_GRID_STEPS steps when the input allows (pipeline depth + v7x megacore).
    tile_rows = min(_TILE_ROWS, _round_up(rows, 8))
    tile_rows = min(tile_rows, _round_up(max(rows // _MIN_GRID_STEPS, 8), 8))
    grid_rows = -(-rows // tile_rows)        # partial last block handled by Pallas

    # scalars hoisted once into SMEM
    params = jnp.stack([eta, mask * eta]).astype(jnp.float32)

    out2d = pl.pallas_call(
        _eta_weights_kernel,
        out_shape=jax.ShapeDtypeStruct((rows, _LANES), jnp.float32),
        grid=(grid_rows,),
        in_specs=[
            pl.BlockSpec(memory_space=pltpu.SMEM),                     # [eta, mask*eta]
            pl.BlockSpec((tile_rows, _LANES), lambda i: (i, 0)),       # loss tile
        ],
        out_specs=pl.BlockSpec((tile_rows, _LANES), lambda i: (i, 0)),
        compiler_params=pltpu.CompilerParams(
            dimension_semantics=("parallel",),                          # megacore sharding on v7x
        ),
        cost_estimate=pl.CostEstimate(
            flops=4 * rows * _LANES, transcendentals=0, bytes_accessed=8 * rows * _LANES,
        ),
    )(params, loss2d)

    out = out2d.reshape(rows * _LANES)       # free bitcast
    return out[:n] if padded else out


class EtaWeights:
    """Thin JAX-side container mirroring the torch module's parameters."""
    # TODO(synk): autograd bookkeeping (requires_grad / Variable / nn.Parameter)
    # has no Pallas equivalent; this implements the forward value computation only.

    def __init__(self, eta: float, min=-np.log(0.5) * 0.5, max=10.0):
        self.eta = jnp.asarray([eta], jnp.float32)     # nn.Parameter([eta])
        self.mask = jnp.asarray([0.0], jnp.float32)    # default mask = 0.0
        self._min = float(min)
        self._max = float(max)

    def clamp(self):
        # mirrors torch.clamp(eta, min, max) applied to the parameter data
        self.eta = jnp.clip(self.eta, self._min, self._max)

    def set_mask(self, mask: float):
        self.mask = jnp.asarray([mask], jnp.float32)

    def __call__(self, loss, *, force_pallas=False):
        return eta_weights_forward(loss, self.eta[0], self.mask[0],
                                   force_pallas=force_pallas)


def _reference(loss, eta, mask):
    loss = np.asarray(loss, np.float32)
    return np.where(loss > eta, loss * mask * eta, -loss / eta + 1.0).astype(np.float32)


if __name__ == "__main__":
    key = jax.random.PRNGKey(0)

    module = EtaWeights(eta=1.0)
    module.set_mask(0.5)
    module.clamp()
    eta_val = float(module.eta[0])
    mask_val = float(module.mask[0])

    k1, k2, k3 = jax.random.split(key, 3)

    # Case 1: tiny per-batch loss vector (module's typical use) -> jnp fast path.
    loss_small = jax.random.uniform(k1, (8,), dtype=jnp.float32, minval=0.0, maxval=2.0)
    out_small = jax.block_until_ready(module(loss_small))
    np.testing.assert_allclose(
        np.asarray(out_small), _reference(np.asarray(loss_small), eta_val, mask_val),
        rtol=1e-5, atol=1e-5)

    # Case 2: lane-aligned input (n % 128 == 0) -> zero-copy Pallas path.
    loss_aligned = jax.random.uniform(k2, (4096,), dtype=jnp.float32, minval=0.0, maxval=2.0)
    out_aligned = jax.block_until_ready(module(loss_aligned, force_pallas=True))
    np.testing.assert_allclose(
        np.asarray(out_aligned), _reference(np.asarray(loss_aligned), eta_val, mask_val),
        rtol=1e-5, atol=1e-5)

    # Case 3: ragged input -> minimal 128-lane pad + partial last grid block.
    loss_ragged = jax.random.uniform(k3, (2500,), dtype=jnp.float32, minval=0.0, maxval=2.0)
    out_ragged = jax.block_until_ready(module(loss_ragged, force_pallas=True))
    np.testing.assert_allclose(
        np.asarray(out_ragged), _reference(np.asarray(loss_ragged), eta_val, mask_val),
        rtol=1e-5, atol=1e-5)

    print("KERNEL_OK")
</pallas_src>

<mosaic_0001>
module attributes {stable_mosaic.version = 11 : i64} {
  func.func @_eta_weights_kernel(%arg0: i32, %arg1: memref<2xf32, #tpu.memory_space<smem>>, %arg2: memref<8x128xf32, #tpu.memory_space<vmem>>, %arg3: memref<8x128xf32, #tpu.memory_space<vmem>>) attributes {dimension_semantics = [#tpu.dimension_semantics<parallel>], iteration_bounds = array<i64: 4>, scalar_prefetch = 0 : i64, scratch_operands = 0 : i64, tpu.core_type = #tpu.core_type<tc>, window_params = [{transform_indices = @transform_0, window_bounds = array<i64: 2>}, {transform_indices = @transform_1, window_bounds = array<i64: 8, 128>}, {transform_indices = @transform_2, window_bounds = array<i64: 8, 128>}]} {
    %c0 = arith.constant 0 : index
    %0 = memref.load %arg1[%c0] : memref<2xf32, #tpu.memory_space<smem>>
    %c1 = arith.constant 1 : index
    %1 = memref.load %arg1[%c1] : memref<2xf32, #tpu.memory_space<smem>>
    %c0_0 = arith.constant 0 : index
    %c0_1 = arith.constant 0 : index
    %2 = vector.load %arg2[%c0_0, %c0_1] : memref<8x128xf32, #tpu.memory_space<vmem>>, vector<8x128xf32>
    %3 = vector.broadcast %1 : f32 to vector<8x128xf32>
    %4 = arith.mulf %2, %3 : vector<8x128xf32>
    %5 = vector.broadcast %0 : f32 to vector<8x128xf32>
    %6 = arith.divf %2, %5 : vector<8x128xf32>
    %cst = arith.constant 1.000000e+00 : f32
    %7 = vector.broadcast %cst : f32 to vector<8x128xf32>
    %8 = arith.subf %7, %6 : vector<8x128xf32>
    %9 = vector.broadcast %0 : f32 to vector<8x128xf32>
    %10 = arith.cmpf ogt, %2, %9 : vector<8x128xf32>
    %11 = arith.select %10, %4, %8 : vector<8x128xi1>, vector<8x128xf32>
    %c0_2 = arith.constant 0 : index
    %c0_3 = arith.constant 0 : index
    %12 = vector.load %arg3[%c0_2, %c0_3] : memref<8x128xf32, #tpu.memory_space<vmem>>, vector<8x128xf32>
    tpu.vector_store %arg3[%c0_2, %c0_3], %11 {strides = array<i32>} : memref<8x128xf32, #tpu.memory_space<vmem>>, vector<8x128xf32>,
    return
  }
  func.func @transform_0(%arg0: i32) -> i32 {
    %c0_i32 = arith.constant 0 : i32
    %c0_i32_0 = arith.constant 0 : i32
    return %c0_i32 : i32
  }
  func.func @transform_1(%arg0: i32) -> (i32, i32) {
    %c0_i32 = arith.constant 0 : i32
    %c0_i32_0 = arith.constant 0 : i32
    return %arg0, %c0_i32 : i32, i32
  }
  func.func @transform_2(%arg0: i32) -> (i32, i32) {
    %c0_i32 = arith.constant 0 : i32
    %c0_i32_0 = arith.constant 0 : i32
    return %arg0, %c0_i32 : i32, i32
  }
}

</mosaic_0001>

<llo_original>
// kernel: tpu_custom_call.1
$region0: #{tpu_custom_call.1}
  #allocation0 [shape = 'u32[]', space=smem, size = 0x4, offset = 0x4, fixed_abs, tag = 'smem constant byte address 0x4 - core index']
  #allocation1 [shape = 'u32[72,128]{1,0:T(1,128)}', space=vmem, size = 0x9000, scoped, tag = 'internal scratch']
  %s0 = inlined_call_operand.hbm [shape: f32[2], index: 0, kind: input, shape index: {}]
  %s1 = inlined_call_operand.hbm [shape: f32[32,128], index: 1, kind: input, shape index: {}]
  %s2 = inlined_call_operand.hbm [shape: f32[32,128], index: 2, kind: output, shape index: {}]
  %s3 = sld [smem:[#allocation0]]
  $region49: #{tpu_custom_call.1} parent=0
    _
  %s5 = ssub.s32 1, %s3
  %s6 = scalar_select 0, %s5, %s3
  $region1: #{tpu_custom_call.1} parent=0
    #allocation2 [shape = 'u8[512]{0}', space=smem, size = 0x200, scoped, tag = 'input window, operand 0, single buffered']
    #allocation3 [shape = 's32[2]{0}', space=sflag, size = 0x8, scoped, tag = 'scoped memory for tpu_custom_call.1']
    #allocation4 [shape = 's32[2]{0}', space=sflag, size = 0x8, scoped, tag = 'scoped memory for tpu_custom_call.1']
    #allocation5 [shape = 's32[2]{0}', space=sflag, size = 0x8, scoped, tag = 'scoped memory for tpu_custom_call.1']
    #allocation6 [shape = 'u8[8192]{0}', space=vmem, size = 0x2000, scoped, tag = 'input window, operand 1']
    #allocation7 [shape = 'u8[8192]{0}', space=vmem, size = 0x2000, scoped, tag = 'output window, operand 0']
    %7 = vsyncpa [#allocation5], 0
    %8 = vsyncpa [#allocation3], 0
    %s9 = scalar_lea.sflag [#allocation3], 1
    %10 = vsyncpa %s9, 0
    %11 = vsyncpa [#allocation4], 0
    %s12 = scalar_lea.sflag [#allocation4], 1
    %13 = vsyncpa %s12, 0
    loop: start=0, step=1, limit=6
    $region2: #{tpu_custom_call.1} parent=1 // loop_pre_header
      _
    $region3: #{tpu_custom_call.1} parent=1 // loop_header
      %s15 = sphi 0, %s19
      %p16 = scmp.ge.s32.totalorder %s15, 6
      %s23 = sphi 0, %s23
      %s25 = sphi 0, %s23
      %s26 = sphi 0, %s25
      %s40 = sphi 0, %s26
      %s46 = sphi 0, %s48
      %s49 = sphi 0, %s46
      %s50 = sphi 0, %s49
      %s66 = sphi 0, %s50
      %s72 = sphi 0, %s74
      %s75 = sphi 0, %s72
      %s76 = sphi 0, %s75
      %s92 = sphi 0, %s76
    $region4: #{tpu_custom_call.1} parent=1 // loop_header_branch
      %18 = sbr.rel (%p16) target = $region8
    $region5: #{tpu_custom_call.1} parent=1 // loop_body
      %s20 = ssub.s32 %s15, 1
      %s21 = ssub.s32 %s15, 2
      %s22 = sadd.s32 %s15, 1
      %s24 = sadd.s32 %s23, 1
      %p27 = scmp.eq.s32.totalorder %s15, 3
      %p28 = scmp.ne.s32.totalorder %s23, %s25
      %p29 = scmp.eq.s32.totalorder %s15, 0
      %p30 = por %p28, %p29
      %p31 = scmp.ne.s32.totalorder %s23, %s25
      %p32 = scmp.eq.s32.totalorder %s20, 3
      %p33 = por %p31, %p32
      %p34 = scmp.ne.s32.totalorder %s25, %s26
      %p35 = scmp.eq.s32.totalorder %s20, 0
      %p36 = por %p34, %p35
      %p37 = scmp.ne.s32.totalorder %s25, %s26
      %p38 = scmp.eq.s32.totalorder %s21, 3
      %p39 = por %p37, %p38
      %p41 = scmp.ne.s32.totalorder %s26, %s40
      %p42 = scmp.eq.s32.totalorder %s21, 0
      %p43 = por %p41, %p42
      %s44 = ssub.s32 %s15, %s22
      %p45 = scmp.eq.s32.totalorder %s44, 0
      %s47 = sadd.s32 %s46, 1
      %s48 = scalar_select %p45, %s46, %s47
      %p51 = pneg %p45
      %p52 = scmp.eq.s32.totalorder %s15, 3
      %p53 = por %p51, %p52
      %p54 = scmp.ne.s32.totalorder %s46, %s49
      %p55 = scmp.eq.s32.totalorder %s15, 0
      %p56 = por %p54, %p55
      %p57 = scmp.ne.s32.totalorder %s46, %s49
      %p58 = scmp.eq.s32.totalorder %s20, 3
      %p59 = por %p57, %p58
      %p60 = scmp.ne.s32.totalorder %s49, %s50
      %p61 = scmp.eq.s32.totalorder %s20, 0
      %p62 = por %p60, %p61
      %p63 = scmp.ne.s32.totalorder %s49, %s50
      %p64 = scmp.eq.s32.totalorder %s21, 3
      %p65 = por %p63, %p64
      %p67 = scmp.ne.s32.totalorder %s50, %s66
      %p68 = scmp.eq.s32.totalorder %s21, 0
      %p69 = por %p67, %p68
      %s70 = ssub.s32 %s15, %s22
      %p71 = scmp.eq.s32.totalorder %s70, 0
      %s73 = sadd.s32 %s72, 1
      %s74 = scalar_select %p71, %s72, %s73
      %p77 = pneg %p71
      %p78 = scmp.eq.s32.totalorder %s15, 3
      %p79 = por %p77, %p78
      %p80 = scmp.ne.s32.totalorder %s72, %s75
      %p81 = scmp.eq.s32.totalorder %s15, 0
      %p82 = por %p80, %p81
      %p83 = scmp.ne.s32.totalorder %s72, %s75
      %p84 = scmp.eq.s32.totalorder %s20, 3
      %p85 = por %p83, %p84
      %p86 = scmp.ne.s32.totalorder %s75, %s76
      %p87 = scmp.eq.s32.totalorder %s20, 0
      %p88 = por %p86, %p87
      %p89 = scmp.ne.s32.totalorder %s75, %s76
      %p90 = scmp.eq.s32.totalorder %s21, 3
      %p91 = por %p89, %p90
      %p93 = scmp.ne.s32.totalorder %s76, %s92
      %p94 = scmp.eq.s32.totalorder %s21, 0
      %p95 = por %p93, %p94
      %p96 = scmp.le.s32.totalorder 1, %s15
      %p97 = scmp.lt.s32.totalorder %s15, 5
      %p98 = pnand %p96, %p97
      %p99 = pneg %p98
      // Predicated region
      $region9: #{tpu_custom_call.1} parent=5 // pred_check
        _
      $region10: #{tpu_custom_call.1} parent=5 // pred_check_branch
        %101 = sbr.rel (%p98) target = $region12
      $region11: #{tpu_custom_call.1} parent=5 // pred_region
        %s102 = ssub.s32 %s15, 1
        // Predicated region
        $region13: #{tpu_custom_call.1} parent=11 // pred_check
          %p103 = pneg %p36
        $region14: #{tpu_custom_call.1} parent=11 // pred_check_branch
          %105 = sbr.rel (%p103) target = $region16
        $region15: #{tpu_custom_call.1} parent=11 // pred_region
          %107 = vsyncadd [#allocation5], 0
          %s109 = sshll.u32 %s0, 4
          %s110 = int_to_ptr.hbm [resolvable:$true] %s109
          %112 = dma.hbm_to_smem %s110, 16, [#allocation2], [#allocation5]
        $region16: #{tpu_custom_call.1} parent=11 // pred_fallthru
          _
      $region12: #{tpu_custom_call.1} parent=5 // pred_fallthru
        _
      %p113 = scmp.lt.s32.totalorder %s15, 4
      // Predicated region
      $region17: #{tpu_custom_call.1} parent=5 // pred_check
        %p114 = pneg %p113
      $region18: #{tpu_custom_call.1} parent=5 // pred_check_branch
        %116 = sbr.rel (%p114) target = $region20
      $region19: #{tpu_custom_call.1} parent=5 // pred_region
        // Predicated region
        $region21: #{tpu_custom_call.1} parent=19 // pred_check
          %p117 = pneg %p56
        $region22: #{tpu_custom_call.1} parent=19 // pred_check_branch
          %119 = sbr.rel (%p117) target = $region24
        $region23: #{tpu_custom_call.1} parent=19 // pred_region
          %s120 = sand.u32 %s46, 1
          %s121 = scalar_lea.sflag [#allocation3], %s120
          %s122 = sand.u32 %s46, 1
          %s123 = smul.addr %s122, 8
          %s124 = scalar_lea.vmem [#allocation6], %s123
          %126 = vsyncadd %s121, 0
          %s127 = smul.addr %s15, 8
          %s128 = scalar_lea.hbm %s1, %s127
          %s130 = sshll.u32 %s128, 4
          %s131 = int_to_ptr.hbm [resolvable:$true] %s130
          %s132 = sshll.u32 %s124, 4
          %s133 = int_to_ptr.vmem [resolvable:$true] %s132
          %135 = dma.hbm_to_vmem [thread:$0]  %s131, 128, %s133, %s121
        $region24: #{tpu_custom_call.1} parent=19 // pred_fallthru
          _
      $region20: #{tpu_custom_call.1} parent=5 // pred_fallthru
        _
      %p136 = scmp.le.s32.totalorder 1, %s15
      %p137 = scmp.lt.s32.totalorder %s15, 5
      %p138 = pnand %p136, %p137
      %p139 = pneg %p138
      // Predicated region
      $region25: #{tpu_custom_call.1} parent=5 // pred_check
        _
      $region26: #{tpu_custom_call.1} parent=5 // pred_check_branch
        %141 = sbr.rel (%p138) target = $region28
      $region27: #{tpu_custom_call.1} parent=5 // pred_region
        %s142 = ssub.s32 %s15, 1
        // Predicated region
        $region29: #{tpu_custom_call.1} parent=27 // pred_check
          %p143 = pneg %p36
        $region30: #{tpu_custom_call.1} parent=27 // pred_check_branch
          %145 = sbr.rel (%p143) target = $region32
        $region31: #{tpu_custom_call.1} parent=27 // pred_region
          %147 = dma.done [#allocation5], 16
        $region32: #{tpu_custom_call.1} parent=27 // pred_fallthru
          _
        %s148 = sand.u32 %s49, 1
        %s149 = scalar_lea.sflag [#allocation3], %s148
        %s150 = sand.u32 %s49, 1
        %s151 = smul.addr %s150, 8
        %s152 = scalar_lea.vmem [#allocation6], %s151
        // Predicated region
        $region33: #{tpu_custom_call.1} parent=27 // pred_check
          %p153 = pneg %p62
        $region34: #{tpu_custom_call.1} parent=27 // pred_check_branch
          %155 = sbr.rel (%p153) target = $region36
        $region35: #{tpu_custom_call.1} parent=27 // pred_region
          %157 = dma.done %s149, 128
        $region36: #{tpu_custom_call.1} parent=27 // pred_fallthru
          _
        %158 = sfence
        %p159 = pneg %p36
        %p160 = pneg %p33
        %s161 = sand.u32 %s49, 1
        %s162 = scalar_lea.sflag [#allocation3], %s161
        %s163 = sand.u32 %s49, 1
        %s164 = smul.addr %s163, 8
        %s165 = scalar_lea.vmem [#allocation6], %s164
        %p166 = pneg %p62
        %p167 = pneg %p59
        %p168 = pneg %p88
        %p169 = pneg %p85
        %s170 = sand.u32 %s75, 1
        %s171 = scalar_lea.sflag [#allocation4], %s170
        %s172 = sand.u32 %s75, 1
        %s173 = smul.addr %s172, 8
        %s174 = scalar_lea.vmem [#allocation7], %s173
        %s175 = sld [smem:[#allocation2]]
        %s176 = sld [smem:[#allocation2 + $0x1]]
        %v177 = vld [vmem:[%s152] sm:$0xff]
        %v178 = vstv %s176
        %v179 = vmul.f32 %v177, %v178
        %v180 = vstv %s175
        %v181 = vrcp.pop %v180
        %v182 = vmul.f32 %v180, %v181
        %v183 = vsub.f32 1.0, %v182
        %v184 = vmul.f32 %v181, %v183
        %v185 = vadd.f32 %v181, %v184
        %vm186 = vweird.f32 %v180
        %vm187 = vweird.f32 %v181
        %vm188 = vmor %vm186, %vm187
        %v189 = vsel %vm188, %v181, %v185
        %v190 = vand.u32 2147483647, %v180
        %vm191 = vcmp.eq.f32.partialorder %v190, 8.507059e+37
        %v192 = vand.u32 %v180, 2147483648
        %v193 = vor.u32 1.1754944e-38, %v192
        %v194 = vsel %vm191, %v193, %v189
        %v195 = vmul.f32 %v177, %v194
        %v196 = vsub.f32 1.0, %v195
        %vm197 = vcmp.gt.f32.partialorder %v177, %v180
        %v198 = vsel %vm197, %v179, %v196
        %199 = vst [vmem:[%s174] sm:$0xff] %v198
        %s200 = sand.u32 %s75, 1
        %s201 = scalar_lea.sflag [#allocation4], %s200
        %s202 = sand.u32 %s75, 1
        %s203 = smul.addr %s202, 8
        %s204 = scalar_lea.vmem [#allocation7], %s203
        // Predicated region
        $region37: #{tpu_custom_call.1} parent=27 // pred_check
          %p205 = pneg %p85
        $region38: #{tpu_custom_call.1} parent=27 // pred_check_branch
          %207 = sbr.rel (%p205) target = $region40
        $region39: #{tpu_custom_call.1} parent=27 // pred_region
          %209 = vsyncadd %s201, 0
          %s210 = smul.addr %s20, 8
          %s211 = scalar_lea.hbm %s2, %s210
          %s213 = sshll.u32 %s204, 4
          %s214 = int_to_ptr.vmem [resolvable:$true] %s213
          %s215 = sshll.u32 %s211, 4
          %s216 = int_to_ptr.hbm [resolvable:$true] %s215
          %218 = dma.vmem_to_hbm [thread:$0]  %s214, 128, %s216, %s201
        $region40: #{tpu_custom_call.1} parent=27 // pred_fallthru
          _
      $region28: #{tpu_custom_call.1} parent=5 // pred_fallthru
        _
      %p219 = scmp.le.s32.totalorder 2, %s15
      // Predicated region
      $region41: #{tpu_custom_call.1} parent=5 // pred_check
        %p220 = pneg %p219
      $region42: #{tpu_custom_call.1} parent=5 // pred_check_branch
        %222 = sbr.rel (%p220) target = $region44
      $region43: #{tpu_custom_call.1} parent=5 // pred_region
        %s223 = ssub.s32 %s15, 2
        // Predicated region
        $region45: #{tpu_custom_call.1} parent=43 // pred_check
          %p224 = pneg %p91
        $region46: #{tpu_custom_call.1} parent=43 // pred_check_branch
          %226 = sbr.rel (%p224) target = $region48
        $region47: #{tpu_custom_call.1} parent=43 // pred_region
          %s227 = sand.u32 %s76, 1
          %s228 = scalar_lea.sflag [#allocation4], %s227
          %s229 = sand.u32 %s76, 1
          %s230 = smul.addr %s229, 8
          %s231 = scalar_lea.vmem [#allocation7], %s230
          %233 = dma.done %s228, 128
        $region48: #{tpu_custom_call.1} parent=43 // pred_fallthru
          _
      $region44: #{tpu_custom_call.1} parent=5 // pred_fallthru
        _
    $region6: #{tpu_custom_call.1} parent=1 // loop_footer
      %s19 = sadd.s32 1, %s15
    $region7: #{tpu_custom_call.1} parent=1 // loop_footer_branch
      %14 = sbr.rel target = $region3
    $region8: #{tpu_custom_call.1} parent=1 // loop_exit
      _
    %234 = vsyncpa [#allocation3], 1
    %s235 = scalar_lea.sflag [#allocation3], 1
    %236 = vsyncpa %s235, 1
    %237 = vsyncpa [#allocation4], 1
    %s238 = scalar_lea.sflag [#allocation4], 1
    %239 = vsyncpa %s238, 1
    %240 = vsyncpa [#allocation5], 1
    %s241 = scalar_lea.sflag [#allocation5], 1
    %242 = vsyncpa %s241, 1

</llo_original>
